<compile_context>
chip_gen: v6e
topology: v6e:2x2x1
jax: 0.10.0
libtpu: 0.0.40
codegen_flags: <defaults>
</compile_context>

<pallas_src>
import functools

import jax
import jax.numpy as jnp
from jax import lax
from jax.experimental import pallas as pl
from jax.experimental.pallas import tpu as pltpu

_MIB = 1024 * 1024
_FF_CHUNK_MAX = 1024          # max f32 hidden slice kept live in the resident kernel
_RESIDENT_MAX_TM = 256        # row tile for the weight-resident path
_KTILED_TM_CANDS = (1024, 512, 256, 128, 64, 32, 16, 8)


# ---------------------------------------------------------------------------
# helpers
# ---------------------------------------------------------------------------
def _round_up(a, b):
    return -(-a // b) * b


def _act(h, activation):
    if activation == "relu":
        return jnp.maximum(h, 0.0)
    # exact gelu, matches torch.nn.functional.gelu default (approximate='none')
    return jax.nn.gelu(h, approximate=False)


def _vmem_capacity_bytes():
    try:
        return int(pltpu.get_tpu_info().vmem_capacity_bytes)
    except Exception:
        return 64 * _MIB  # v7x per-core capacity; conservative default


def _num_tensorcores():
    """TensorCores addressable by one pallas_call (megacore v4/v5p, v7x -> 2)."""
    try:
        info = pltpu.get_tpu_info()
        for name in ("num_tensorcores", "tensorcore_count", "num_cores", "core_count"):
            v = getattr(info, name, None)
            if isinstance(v, int) and v > 0:
                return v
    except Exception:
        pass
    try:
        kind = jax.devices()[0].device_kind.lower()
        if ("lite" in kind or "v5e" in kind or "v6e" in kind
                or "v2" in kind or "v3" in kind):
            return 1
        if "v4" in kind or "v5p" in kind or "7" in kind:
            return 2
    except Exception:
        pass
    return 1


@functools.lru_cache(maxsize=None)
def _buffered_one_supported():
    """Probe once whether pipeline_mode=pl.Buffered(1) lowers/compiles on this backend."""
    try:
        pm = pl.Buffered(1)

        def _probe(x_ref, o_ref):
            o_ref[...] = x_ref[...] + 1.0

        fn = pl.pallas_call(
            _probe,
            out_shape=jax.ShapeDtypeStruct((8, 128), jnp.float32),
            grid=(2,),
            in_specs=[pl.BlockSpec((8, 128), lambda i: (0, 0), pipeline_mode=pm)],
            out_specs=pl.BlockSpec((8, 128), lambda i: (0, 0)),
        )
        jax.jit(fn).lower(jax.ShapeDtypeStruct((8, 128), jnp.float32)).compile()
        return True
    except Exception:
        return False


def _min_tm(dtype):
    # sub-32-bit dtypes pack along sublanes: (16,128) bf16 / (32,128) int8 native tiles
    b = jnp.dtype(dtype).itemsize
    return 8 if b >= 4 else (16 if b == 2 else 32)


def _pick_ff_chunk(ff_p):
    if ff_p <= _FF_CHUNK_MAX:
        return ff_p
    for c in (1024, 512, 256, 128):
        if ff_p % c == 0:
            return c
    return ff_p


def _pick_tm_resident(rows, dtype, n_cores):
    mmin = _min_tm(dtype)
    if rows <= _RESIDENT_MAX_TM:
        # Split into two equal tiles only when there are >=2 TensorCores AND the split
        # stays a multiple of the dtype-native sublane tile (no partial blocks).
        if n_cores >= 2 and rows >= 2 * mmin and rows % (2 * mmin) == 0:
            return rows // 2
        return rows                    # one block == full row extent (always legal)
    return _RESIDENT_MAX_TM            # last block may be partial; Pallas masks OOB rows


def _pick_ktiled_tiles(rows, dtype, n_cores, ff_p, fits, forced_fb=None):
    mmin = _min_tm(dtype)
    fb_cands = ([forced_fb] if forced_fb is not None
                else [f for f in (1024, 512, 256, 128) if f <= max(ff_p, 128)])
    if rows <= 1024:
        tm_cands = []
        if n_cores >= 2 and rows >= 2 * mmin and rows % (2 * mmin) == 0:
            tm_cands.append(rows // 2)
        tm_cands.append(rows)          # single full-extent row block
        tm_cands += [c for c in _KTILED_TM_CANDS if mmin <= c < rows]
    else:
        tm_cands = [c for c in _KTILED_TM_CANDS if c >= mmin]
    # W1/W2 are re-streamed from HBM once per row tile -> prefer the largest tm that
    # fits the VMEM budget; ff_block only changes step granularity, not weight traffic.
    for tmc in tm_cands:
        for fb in fb_cands:
            if fits(tmc, fb):
                return tmc, fb
    return tm_cands[-1], fb_cands[-1]


def _vmem_need_bytes(*, tm, d_p, ff_blk, ff_chunk, in_bytes, cdt_bytes, ktiled,
                     single_buf_consts):
    io = 2 * (2 * tm * d_p * in_bytes)                        # x + out tiles, double-buffered
    if ktiled:
        w = 2 * (2 * d_p * ff_blk * cdt_bytes + ff_blk * 4)   # W1/W2/b1 slices (vary with k)
        w += (1 if single_buf_consts else 2) * d_p * 4        # b2 (grid-constant)
        h = tm * ff_blk * 4                                   # f32 hidden
        acc = tm * d_p * 4                                    # f32 accumulator scratch
    else:
        wb = 1 if single_buf_consts else 2                    # grid-constant weights: 1 buffer
        w = wb * (2 * d_p * ff_blk * cdt_bytes + (ff_blk + d_p) * 4)
        h = tm * ff_chunk * 4                                 # f32 hidden chunk
        acc = tm * d_p * 4 if ff_chunk < ff_blk else 0        # f32 y carry when chunked
    return io + w + h + acc


# ---------------------------------------------------------------------------
# kernels
# ---------------------------------------------------------------------------
def _ffn_kernel(x_ref, w1_ref, b1_ref, w2_ref, b2_ref, o_ref, *,
                activation, compute_dtype, ff_chunk):
    """Weight-resident path: full W1/W2 live in VMEM; one row tile per grid step."""
    x = x_ref[...].astype(compute_dtype)
    ff_p = w1_ref.shape[1]
    if ff_chunk >= ff_p:
        h = jnp.dot(x, w1_ref[...], preferred_element_type=jnp.float32)
        h = _act(h + b1_ref[...], activation)                 # biases already f32
        y = jnp.dot(h.astype(compute_dtype), w2_ref[...],
                    preferred_element_type=jnp.float32)
    else:
        # Chunk the hidden dim so the f32 intermediate stays small (spill/VMEM relief).
        n_chunks = ff_p // ff_chunk

        def body(c, y):
            off = pl.multiple_of(c * ff_chunk, ff_chunk)
            h = jnp.dot(x, w1_ref[:, pl.ds(off, ff_chunk)],
                        preferred_element_type=jnp.float32)
            h = _act(h + b1_ref[:, pl.ds(off, ff_chunk)], activation)
            return y + jnp.dot(h.astype(compute_dtype),
                               w2_ref[pl.ds(off, ff_chunk), :],
                               preferred_element_type=jnp.float32)

        y = lax.fori_loop(0, n_chunks, body,
                          jnp.zeros((x.shape[0], o_ref.shape[1]), jnp.float32),
                          unroll=n_chunks <= 8)
    # TODO(synk): dropout is identity at inference; training dropout needs pltpu.prng_*.
    o_ref[...] = (y + b2_ref[...]).astype(o_ref.dtype)


def _ffn_kernel_ktiled(x_ref, w1_ref, b1_ref, w2_ref, b2_ref, o_ref, acc_ref, *,
                       activation, compute_dtype):
    """Weight-streaming path: grid = (row tiles, ff_dim tiles); f32 VMEM accumulator."""
    k = pl.program_id(1)

    @pl.when(k == 0)
    def _():
        acc_ref[...] = jnp.zeros_like(acc_ref)

    x = x_ref[...].astype(compute_dtype)
    h = jnp.dot(x, w1_ref[...], preferred_element_type=jnp.float32)
    h = _act(h + b1_ref[...], activation)
    acc_ref[...] += jnp.dot(h.astype(compute_dtype), w2_ref[...],
                            preferred_element_type=jnp.float32)

    @pl.when(k == pl.num_programs(1) - 1)
    def _():
        o_ref[...] = (acc_ref[...] + b2_ref[...]).astype(o_ref.dtype)


# ---------------------------------------------------------------------------
# wrapper
# ---------------------------------------------------------------------------
def feed_forward(x, w1, b1, w2, b2, *, activation="relu", compute_dtype=None,
                 tm=None, ff_block=None):
    """x: (B, L, d_model); w1: (d_model, ff_dim); w2: (ff_dim, d_model).

    Conv1d(k=1) weights are stored transposed so both matmuls are plain row-major.
    `compute_dtype` sets the MXU input precision (default bf16 for float inputs,
    f32 accumulation either way).  `ff_block` forces the ff_dim-streaming path.
    """
    assert activation in ("relu", "gelu")
    B, L, d_model = x.shape
    ff_dim = w1.shape[1]
    rows = B * L
    in_bytes = jnp.dtype(x.dtype).itemsize

    if compute_dtype is None:
        compute_dtype = (jnp.bfloat16
                         if x.dtype in (jnp.float32, jnp.bfloat16) else x.dtype)
    cdt_bytes = jnp.dtype(compute_dtype).itemsize

    d_p = _round_up(d_model, 128)
    ff_p = _round_up(ff_dim, 128)

    n_cores = _num_tensorcores()
    single_buf = _buffered_one_supported()       # probed once, cached
    cap = _vmem_capacity_bytes()
    budget = int(0.8 * cap)

    # ---- choose execution path / tiles ---------------------------------------
    ff_chunk = _pick_ff_chunk(ff_p)
    tm_res = tm if tm is not None else _pick_tm_resident(rows, x.dtype, n_cores)
    need_res = _vmem_need_bytes(tm=tm_res, d_p=d_p, ff_blk=ff_p, ff_chunk=ff_chunk,
                                in_bytes=in_bytes, cdt_bytes=cdt_bytes,
                                ktiled=False, single_buf_consts=single_buf)
    use_ktiled = ff_block is not None or need_res > budget

    if use_ktiled:
        forced_fb = None if ff_block is None else _round_up(min(ff_block, ff_p), 128)

        def fits(tmc, fb):
            return _vmem_need_bytes(tm=tmc, d_p=d_p, ff_blk=fb, ff_chunk=fb,
                                    in_bytes=in_bytes, cdt_bytes=cdt_bytes,
                                    ktiled=True,
                                    single_buf_consts=single_buf) <= budget

        tm_k, fb = _pick_ktiled_tiles(rows, x.dtype, n_cores, ff_p, fits, forced_fb)
        if tm is not None:
            tm_k = tm
        ff_p = _round_up(ff_p, fb)
        tm_used, ff_used = tm_k, fb
        need = _vmem_need_bytes(tm=tm_used, d_p=d_p, ff_blk=fb, ff_chunk=fb,
                                in_bytes=in_bytes, cdt_bytes=cdt_bytes,
                                ktiled=True, single_buf_consts=single_buf)
    else:
        tm_used, ff_used = tm_res, ff_p
        need = need_res

    # ---- operand prep (feature padding only; rows are never padded) -----------
    x2d = x.reshape(rows, d_model)
    if d_p != d_model:
        x2d = jnp.pad(x2d, ((0, 0), (0, d_p - d_model)))
    # Weights/biases are grid constants: pad + cast once here (hoisted/CSE'd by XLA
    # when weights are loop-invariant under jit).  Biases pre-cast to f32 so the
    # kernel adds them without a per-step cast.  Zero-padded rows/cols contribute 0.
    w1p = jnp.pad(w1, ((0, d_p - d_model), (0, ff_p - ff_dim))).astype(compute_dtype)
    w2p = jnp.pad(w2, ((0, ff_p - ff_dim), (0, d_p - d_model))).astype(compute_dtype)
    b1p = jnp.pad(b1.astype(jnp.float32), (0, ff_p - ff_dim)).reshape(1, ff_p)
    b2p = jnp.pad(b2.astype(jnp.float32), (0, d_p - d_model)).reshape(1, d_p)

    gm = pl.cdiv(rows, tm_used)
    n_k = (ff_p // ff_used) if use_ktiled else 1

    # weights read once on the resident path, once per row tile on the streaming path
    w_bytes = 2 * d_p * ff_p * cdt_bytes + (ff_p + d_p) * 4
    if use_ktiled:
        w_bytes *= gm
    cost = pl.CostEstimate(
        flops=int(4 * rows * d_p * ff_p),
        transcendentals=int(rows * ff_p) if activation == "gelu" else 0,
        bytes_accessed=int(2 * rows * d_p * in_bytes + w_bytes))

    vmem_limit = int(min(max(int(need * 1.25), 8 * _MIB), int(0.9 * cap)))

    out_shape = jax.ShapeDtypeStruct((rows, d_p), x.dtype)

    def const_spec(shape, index_map):
        # Grid-invariant operands: single buffer halves their VMEM footprint when the
        # backend supports Buffered(1) (probed once; no per-call fallback/try-except).
        if single_buf:
            return pl.BlockSpec(shape, index_map, pipeline_mode=pl.Buffered(1))
        return pl.BlockSpec(shape, index_map)

    if use_ktiled:
        # NOTE(v7x): with the row axis "parallel", both TensorCores stream the same
        # W1/W2 slices (2x weight HBM reads).  If a weight-bandwidth-bound case shows
        # up, measure a single-core variant / output-dim split instead.
        grid = (gm, n_k)
        in_specs = [
            pl.BlockSpec((tm_used, d_p), lambda i, k: (i, 0)),     # x tile
            pl.BlockSpec((d_p, ff_used), lambda i, k: (0, k)),     # W1 column slice
            pl.BlockSpec((1, ff_used), lambda i, k: (0, k)),       # b1 slice (f32)
            pl.BlockSpec((ff_used, d_p), lambda i, k: (k, 0)),     # W2 row slice
            const_spec((1, d_p), lambda i, k: (0, 0)),             # b2 (constant, f32)
        ]
        out_specs = pl.BlockSpec((tm_used, d_p), lambda i, k: (i, 0))
        scratch = [pltpu.VMEM((tm_used, d_p), jnp.float32)]
        dim_sem = ("parallel", "arbitrary")
        kernel = functools.partial(_ffn_kernel_ktiled, activation=activation,
                                   compute_dtype=compute_dtype)
    else:
        grid = (gm,)
        in_specs = [
            pl.BlockSpec((tm_used, d_p), lambda i: (i, 0)),        # x tile
            const_spec((d_p, ff_p), lambda i: (0, 0)),             # W1 (resident)
            const_spec((1, ff_p), lambda i: (0, 0)),               # b1 (f32)
            const_spec((ff_p, d_p), lambda i: (0, 0)),             # W2 (resident)
            const_spec((1, d_p), lambda i: (0, 0)),                # b2 (f32)
        ]
        out_specs = pl.BlockSpec((tm_used, d_p), lambda i: (i, 0))
        scratch = []
        dim_sem = ("parallel",)
        kernel = functools.partial(_ffn_kernel, activation=activation,
                                   compute_dtype=compute_dtype, ff_chunk=ff_chunk)

    out2d = pl.pallas_call(
        kernel,
        out_shape=out_shape,
        grid_spec=pltpu.PrefetchScalarGridSpec(
            num_scalar_prefetch=0,
            grid=grid,
            in_specs=in_specs,
            out_specs=out_specs,
            scratch_shapes=scratch),
        compiler_params=pltpu.CompilerParams(
            dimension_semantics=dim_sem,
            vmem_limit_bytes=vmem_limit),
        cost_estimate=cost,
    )(x2d, w1p, b1p, w2p, b2p)

    if d_p != d_model:
        out2d = out2d[:, :d_model]
    return out2d.reshape(B, L, d_model)


# ---------------------------------------------------------------------------
# reference + demo
# ---------------------------------------------------------------------------
def _ref_feed_forward(x, w1, b1, w2, b2, activation="relu"):
    h = jnp.einsum("bld,df->blf", x, w1) + b1
    h = jnp.maximum(h, 0.0) if activation == "relu" else jax.nn.gelu(h, approximate=False)
    return jnp.einsum("blf,fd->bld", h, w2) + b2


if __name__ == "__main__":
    key = jax.random.PRNGKey(0)
    kx, k1, k2, k3, k4 = jax.random.split(key, 5)

    # ---- test 1: resident-weight path, exact f32 matmuls ----
    B, L, d_model, ff_dim = 2, 8, 32, 64
    bound1 = 1.0 / (d_model ** 0.5)   # PyTorch Conv1d default init bound (fan_in = in_ch*k)
    bound2 = 1.0 / (ff_dim ** 0.5)
    # torch conv1.weight is (ff_dim, d_model, 1) -> stored transposed as (d_model, ff_dim)
    w1 = jax.random.uniform(k1, (d_model, ff_dim), jnp.float32, -bound1, bound1)
    b1 = jax.random.uniform(k2, (ff_dim,), jnp.float32, -bound1, bound1)
    w2 = jax.random.uniform(k3, (ff_dim, d_model), jnp.float32, -bound2, bound2)
    b2 = jax.random.uniform(k4, (d_model,), jnp.float32, -bound2, bound2)
    x = jax.random.normal(kx, (B, L, d_model), jnp.float32)

    out = jax.block_until_ready(
        feed_forward(x, w1, b1, w2, b2, activation="relu", compute_dtype=jnp.float32))
    ref = _ref_feed_forward(x, w1, b1, w2, b2, "relu")
    assert out.shape == (B, L, d_model)
    assert jnp.allclose(out, ref, atol=1e-5, rtol=1e-5), float(jnp.max(jnp.abs(out - ref)))

    # ---- test 2: ff_dim-tiled accumulator path (forced ff_block -> 2 k-steps) ----
    ff_dim2 = 256
    bound2b = 1.0 / (ff_dim2 ** 0.5)
    w1b = jax.random.uniform(k1, (d_model, ff_dim2), jnp.float32, -bound1, bound1)
    b1b = jax.random.uniform(k2, (ff_dim2,), jnp.float32, -bound1, bound1)
    w2b = jax.random.uniform(k3, (ff_dim2, d_model), jnp.float32, -bound2b, bound2b)
    b2b = jax.random.uniform(k4, (d_model,), jnp.float32, -bound2b, bound2b)

    out2 = jax.block_until_ready(
        feed_forward(x, w1b, b1b, w2b, b2b, activation="relu",
                     ff_block=128, compute_dtype=jnp.float32))
    ref2 = _ref_feed_forward(x, w1b, b1b, w2b, b2b, "relu")
    assert out2.shape == (B, L, d_model)
    assert jnp.allclose(out2, ref2, atol=1e-4, rtol=1e-4), float(jnp.max(jnp.abs(out2 - ref2)))

    # ---- test 3: default bf16-MXU path under jax.jit, non-multiple-of-8 row count ----
    # (rows=14: single full-extent row block, no row padding or output slicing copies)
    xb = jax.random.normal(kx, (2, 7, d_model), jnp.float32)
    ff = jax.jit(functools.partial(feed_forward, activation="relu"))
    out3 = jax.block_until_ready(ff(xb, w1, b1, w2, b2))
    ref3 = _ref_feed_forward(xb, w1, b1, w2, b2, "relu")
    assert out3.shape == (2, 7, d_model)
    assert float(jnp.max(jnp.abs(out3 - ref3))) < 3e-2, float(jnp.max(jnp.abs(out3 - ref3)))

    print("KERNEL_OK")
</pallas_src>

<mosaic_0001>
module attributes {stable_mosaic.version = 11 : i64} {
  func.func @_ffn_kernel(%arg0: i32, %arg1: memref<16x128xf32, #tpu.memory_space<vmem>>, %arg2: memref<128x128xf32, #tpu.memory_space<vmem>>, %arg3: memref<1x128xf32, #tpu.memory_space<vmem>>, %arg4: memref<128x128xf32, #tpu.memory_space<vmem>>, %arg5: memref<1x128xf32, #tpu.memory_space<vmem>>, %arg6: memref<16x128xf32, #tpu.memory_space<vmem>>) attributes {dimension_semantics = [#tpu.dimension_semantics<parallel>], iteration_bounds = array<i64: 1>, scalar_prefetch = 0 : i64, scratch_operands = 0 : i64, tpu.core_type = #tpu.core_type<tc>, window_params = [{transform_indices = @transform_0, window_bounds = array<i64: 16, 128>}, {pipeline_mode = #tpu.pipeline_mode<synchronous>, transform_indices = @transform_1, window_bounds = array<i64: 128, 128>}, {pipeline_mode = #tpu.pipeline_mode<synchronous>, transform_indices = @transform_2, window_bounds = array<i64: 1, 128>}, {pipeline_mode = #tpu.pipeline_mode<synchronous>, transform_indices = @transform_3, window_bounds = array<i64: 128, 128>}, {pipeline_mode = #tpu.pipeline_mode<synchronous>, transform_indices = @transform_4, window_bounds = array<i64: 1, 128>}, {transform_indices = @transform_5, window_bounds = array<i64: 16, 128>}]} {
    %c0 = arith.constant 0 : index
    %c0_0 = arith.constant 0 : index
    %0 = vector.load %arg1[%c0, %c0_0] : memref<16x128xf32, #tpu.memory_space<vmem>>, vector<16x128xf32>
    %c0_1 = arith.constant 0 : index
    %c0_2 = arith.constant 0 : index
    %1 = vector.load %arg2[%c0_1, %c0_2] : memref<128x128xf32, #tpu.memory_space<vmem>>, vector<128x128xf32>
    %cst = arith.constant dense<0.000000e+00> : vector<16x128xf32>
    %2 = tpu.matmul %0, %1, %cst {dimension_numbers = #tpu.dot_dimension_numbers<[1], [0], [0], [1], [0, 0, 1, 1], [], []>} : vector<16x128xf32>, vector<128x128xf32>, vector<16x128xf32> -> vector<16x128xf32>
    %c0_3 = arith.constant 0 : index
    %c0_4 = arith.constant 0 : index
    %3 = vector.load %arg3[%c0_3, %c0_4] : memref<1x128xf32, #tpu.memory_space<vmem>>, vector<1x128xf32>
    %4 = vector.broadcast %3 : vector<1x128xf32> to vector<16x128xf32>
    %5 = arith.addf %2, %4 : vector<16x128xf32>
    %cst_5 = arith.constant 0.000000e+00 : f32
    %6 = vector.broadcast %cst_5 : f32 to vector<16x128xf32>
    %7 = arith.maximumf %5, %6 : vector<16x128xf32>
    %c0_6 = arith.constant 0 : index
    %c0_7 = arith.constant 0 : index
    %8 = vector.load %arg4[%c0_6, %c0_7] : memref<128x128xf32, #tpu.memory_space<vmem>>, vector<128x128xf32>
    %cst_8 = arith.constant dense<0.000000e+00> : vector<16x128xf32>
    %9 = tpu.matmul %7, %8, %cst_8 {dimension_numbers = #tpu.dot_dimension_numbers<[1], [0], [0], [1], [0, 0, 1, 1], [], []>} : vector<16x128xf32>, vector<128x128xf32>, vector<16x128xf32> -> vector<16x128xf32>
    %c0_9 = arith.constant 0 : index
    %c0_10 = arith.constant 0 : index
    %10 = vector.load %arg5[%c0_9, %c0_10] : memref<1x128xf32, #tpu.memory_space<vmem>>, vector<1x128xf32>
    %11 = vector.broadcast %10 : vector<1x128xf32> to vector<16x128xf32>
    %12 = arith.addf %9, %11 : vector<16x128xf32>
    %c0_11 = arith.constant 0 : index
    %c0_12 = arith.constant 0 : index
    %13 = vector.load %arg6[%c0_11, %c0_12] : memref<16x128xf32, #tpu.memory_space<vmem>>, vector<16x128xf32>
    tpu.vector_store %arg6[%c0_11, %c0_12], %12 {strides = array<i32>} : memref<16x128xf32, #tpu.memory_space<vmem>>, vector<16x128xf32>,
    return
  }
  func.func @transform_0(%arg0: i32) -> (i32, i32) {
    %c0_i32 = arith.constant 0 : i32
    %c0_i32_0 = arith.constant 0 : i32
    return %arg0, %c0_i32 : i32, i32
  }
  func.func @transform_1(%arg0: i32) -> (i32, i32) {
    %c0_i32 = arith.constant 0 : i32
    %c0_i32_0 = arith.constant 0 : i32
    %c0_i32_1 = arith.constant 0 : i32
    return %c0_i32, %c0_i32_0 : i32, i32
  }
  func.func @transform_2(%arg0: i32) -> (i32, i32) {
    %c0_i32 = arith.constant 0 : i32
    %c0_i32_0 = arith.constant 0 : i32
    %c0_i32_1 = arith.constant 0 : i32
    return %c0_i32, %c0_i32_0 : i32, i32
  }
  func.func @transform_3(%arg0: i32) -> (i32, i32) {
    %c0_i32 = arith.constant 0 : i32
    %c0_i32_0 = arith.constant 0 : i32
    %c0_i32_1 = arith.constant 0 : i32
    return %c0_i32, %c0_i32_0 : i32, i32
  }
  func.func @transform_4(%arg0: i32) -> (i32, i32) {
    %c0_i32 = arith.constant 0 : i32
    %c0_i32_0 = arith.constant 0 : i32
    %c0_i32_1 = arith.constant 0 : i32
    return %c0_i32, %c0_i32_0 : i32, i32
  }
  func.func @transform_5(%arg0: i32) -> (i32, i32) {
    %c0_i32 = arith.constant 0 : i32
    %c0_i32_0 = arith.constant 0 : i32
    return %arg0, %c0_i32 : i32, i32
  }
}

</mosaic_0001>

<llo_original>
// kernel: tpu_custom_call.1
$region0: #{tpu_custom_call.1}
  #allocation0 [shape = 'u32[]', space=smem, size = 0x4, offset = 0x4, fixed_abs, tag = 'smem constant byte address 0x4 - core index']
  #allocation1 [shape = 'u32[144,128]{1,0:T(1,128)}', space=vmem, size = 0x12000, scoped, tag = 'internal scratch']
  %s0 = inlined_call_operand.hbm [shape: f32[16,128], index: 0, kind: input, shape index: {}]
  %s1 = inlined_call_operand.hbm [shape: f32[128,128], index: 1, kind: input, shape index: {}]
  %s2 = inlined_call_operand.vmem [shape: f32[1,128], index: 2, kind: input, shape index: {}]
  %s3 = inlined_call_operand.hbm [shape: f32[128,128], index: 3, kind: input, shape index: {}]
  %s4 = inlined_call_operand.vmem [shape: f32[1,128], index: 4, kind: input, shape index: {}]
  %s5 = inlined_call_operand.hbm [shape: f32[16,128], index: 5, kind: output, shape index: {}]
  %s6 = sld [smem:[#allocation0]]
  $region42: #{tpu_custom_call.1} parent=0
    _
  %s8 = ssub.s32 1, %s6
  %s9 = scalar_select 0, %s8, %s6
  $region1: #{tpu_custom_call.1} parent=0
    #allocation2 [shape = 'u8[8192]{0}', space=vmem, size = 0x2000, scoped, tag = 'input window, operand 0, single buffered']
    #allocation3 [shape = 's32[1]{0}', space=sflag, size = 0x4, scoped, tag = 'scoped memory for tpu_custom_call.1']
    #allocation4 [shape = 's32[1]{0}', space=sflag, size = 0x4, scoped, tag = 'scoped memory for tpu_custom_call.1']
    #allocation5 [shape = 'u8[65536]{0}', space=vmem, size = 0x10000, scoped, tag = 'input window, operand 1, single buffered']
    #allocation6 [shape = 's32[1]{0}', space=sflag, size = 0x4, scoped, tag = 'scoped memory for tpu_custom_call.1']
    #allocation7 [shape = 'u8[65536]{0}', space=vmem, size = 0x10000, scoped, tag = 'input window, operand 3, single buffered']
    #allocation8 [shape = 'u8[8192]{0}', space=vmem, size = 0x2000, scoped, tag = 'output window, operand 0, single buffered']
    %10 = vsyncpa [#allocation3], 0
    %11 = vsyncpa [#allocation6], 0
    %12 = vsyncpa [#allocation4], 0
    // Predicated region
    $region2: #{tpu_custom_call.1} parent=1 // pred_check
      _
    $region3: #{tpu_custom_call.1} parent=1 // pred_check_branch
      %14 = sbr.rel (0) target = $region5
    $region4: #{tpu_custom_call.1} parent=1 // pred_region
      %s16 = ssub.s32 256, 256
      %17 = vsyncadd [#allocation3], %s16
      %s18 = sshll.u32 [#allocation2], 4
      %s19 = int_to_ptr.vmem [resolvable:$true] %s18
      %24 = dma.hbm_to_vmem [thread:$0]  %s0, 256, %s19, [#allocation3], 128, 128, 8
    $region5: #{tpu_custom_call.1} parent=1 // pred_fallthru
      _
    // Predicated region
    $region6: #{tpu_custom_call.1} parent=1 // pred_check
      _
    $region7: #{tpu_custom_call.1} parent=1 // pred_check_branch
      %26 = sbr.rel (0) target = $region9
    $region8: #{tpu_custom_call.1} parent=1 // pred_region
      %s28 = ssub.s32 2048, 2048
      %29 = vsyncadd [#allocation6], %s28
      %s30 = sshll.u32 [#allocation5], 4
      %s31 = int_to_ptr.vmem [resolvable:$true] %s30
      %36 = dma.hbm_to_vmem [thread:$0]  %s1, 2048, %s31, [#allocation6], 128, 128, 8
    $region9: #{tpu_custom_call.1} parent=1 // pred_fallthru
      _
    // Predicated region
    $region10: #{tpu_custom_call.1} parent=1 // pred_check
      _
    $region11: #{tpu_custom_call.1} parent=1 // pred_check_branch
      %38 = sbr.rel (0) target = $region13
    $region12: #{tpu_custom_call.1} parent=1 // pred_region
      _
    $region13: #{tpu_custom_call.1} parent=1 // pred_fallthru
      _
    // Predicated region
    $region14: #{tpu_custom_call.1} parent=1 // pred_check
      _
    $region15: #{tpu_custom_call.1} parent=1 // pred_check_branch
      %40 = sbr.rel (0) target = $region17
    $region16: #{tpu_custom_call.1} parent=1 // pred_region
      %s42 = ssub.s32 2048, 2048
      %43 = vsyncadd [#allocation6], %s42
      %s44 = sshll.u32 [#allocation7], 4
      %s45 = int_to_ptr.vmem [resolvable:$true] %s44
      %50 = dma.hbm_to_vmem [thread:$0]  %s3, 2048, %s45, [#allocation6], 128, 128, 8
    $region17: #{tpu_custom_call.1} parent=1 // pred_fallthru
      _
    // Predicated region
    $region18: #{tpu_custom_call.1} parent=1 // pred_check
      _
    $region19: #{tpu_custom_call.1} parent=1 // pred_check_branch
      %52 = sbr.rel (0) target = $region21
    $region20: #{tpu_custom_call.1} parent=1 // pred_region
      _
    $region21: #{tpu_custom_call.1} parent=1 // pred_fallthru
      _
    // Predicated region
    $region22: #{tpu_custom_call.1} parent=1 // pred_check
      _
    $region23: #{tpu_custom_call.1} parent=1 // pred_check_branch
      %54 = sbr.rel (0) target = $region25
    $region24: #{tpu_custom_call.1} parent=1 // pred_region
      %55 = dma.done [#allocation3], 256
    $region25: #{tpu_custom_call.1} parent=1 // pred_fallthru
      _
    // Predicated region
    $region26: #{tpu_custom_call.1} parent=1 // pred_check
      _
    $region27: #{tpu_custom_call.1} parent=1 // pred_check_branch
      %57 = sbr.rel (0) target = $region29
    $region28: #{tpu_custom_call.1} parent=1 // pred_region
      %58 = dma.done [#allocation6], 2048
    $region29: #{tpu_custom_call.1} parent=1 // pred_fallthru
      _
    // Predicated region
    $region30: #{tpu_custom_call.1} parent=1 // pred_check
      _
    $region31: #{tpu_custom_call.1} parent=1 // pred_check_branch
      %60 = sbr.rel (0) target = $region33
    $region32: #{tpu_custom_call.1} parent=1 // pred_region
      %61 = dma.done [#allocation6], 2048
    $region33: #{tpu_custom_call.1} parent=1 // pred_fallthru
      _
    %v62 = vld [vmem:[#allocation2] sm:$0xff]
    %v63 = vld [vmem:[#allocation2 + $0x8] sm:$0xff]
    %v64 = vld [vmem:[#allocation5] sm:$0xff]
    %v65 = vld [vmem:[#allocation5 + $0x8] sm:$0xff]
    %v66 = vld [vmem:[#allocation5 + $0x10] sm:$0xff]
    %v67 = vld [vmem:[#allocation5 + $0x18] sm:$0xff]
    %v68 = vld [vmem:[#allocation5 + $0x20] sm:$0xff]
    %v69 = vld [vmem:[#allocation5 + $0x28] sm:$0xff]
    %v70 = vld [vmem:[#allocation5 + $0x30] sm:$0xff]
    %v71 = vld [vmem:[#allocation5 + $0x38] sm:$0xff]
    %v72 = vld [vmem:[#allocation5 + $0x40] sm:$0xff]
    %v73 = vld [vmem:[#allocation5 + $0x48] sm:$0xff]
    %v74 = vld [vmem:[#allocation5 + $0x50] sm:$0xff]
    %v75 = vld [vmem:[#allocation5 + $0x58] sm:$0xff]
    %v76 = vld [vmem:[#allocation5 + $0x60] sm:$0xff]
    %v77 = vld [vmem:[#allocation5 + $0x68] sm:$0xff]
    %v78 = vld [vmem:[#allocation5 + $0x70] sm:$0xff]
    %v79 = vld [vmem:[#allocation5 + $0x78] sm:$0xff]
    %v80 = vld [vmem:[%s2] sm:$0x1]
    %v82 = vlaneseq
    %v83 = vshrl.u32 %v82, 7
    %v84 = vsub.s32 0, %v83
    %v85 = vrot.slane %v80, %v84
    %87 = vmatprep.subr.mxu0 0.0
    %88 = vmatpush1.msra.mxu0 %v79
    %89 = vmatprep.subr.mxu0 0.0
    %90 = vmatpush1.msra.mxu0 %v78
    %91 = vmatprep.subr.mxu0 0.0
    %92 = vmatpush1.msra.mxu0 %v77
    %93 = vmatprep.subr.mxu0 0.0
    %94 = vmatpush1.msra.mxu0 %v76
    %95 = vmatprep.subr.mxu0 0.0
    %96 = vmatpush1.msra.mxu0 %v75
    %97 = vmatprep.subr.mxu0 0.0
    %98 = vmatpush1.msra.mxu0 %v74
    %99 = vmatprep.subr.mxu0 0.0
    %100 = vmatpush1.msra.mxu0 %v73
    %101 = vmatprep.subr.mxu0 0.0
    %102 = vmatpush1.msra.mxu0 %v72
    %103 = vmatprep.subr.mxu0 0.0
    %104 = vmatpush1.msra.mxu0 %v71
    %105 = vmatprep.subr.mxu0 0.0
    %106 = vmatpush1.msra.mxu0 %v70
    %107 = vmatprep.subr.mxu0 0.0
    %108 = vmatpush1.msra.mxu0 %v69
    %109 = vmatprep.subr.mxu0 0.0
    %110 = vmatpush1.msra.mxu0 %v68
    %111 = vmatprep.subr.mxu0 0.0
    %112 = vmatpush1.msra.mxu0 %v67
    %113 = vmatprep.subr.mxu0 0.0
    %114 = vmatpush1.msra.mxu0 %v66
    %115 = vmatprep.subr.mxu0 0.0
    %116 = vmatpush1.msra.mxu0 %v65
    %117 = vmatprep.subr.mxu0 0.0
    %118 = vmatpush1.msra.mxu0 %v64
    %119 = vmatprep.subr.mxu0 0.0
    %120 = vmatpush2.msra.mxu0 0.0
    %121 = vmatprep.subr.mxu0 0.0
    %122 = vmatpush2.msra.mxu0 0.0
    %123 = vmatprep.subr.mxu0 0.0
    %124 = vmatpush2.msra.mxu0 0.0
    %125 = vmatprep.subr.mxu0 0.0
    %126 = vmatpush2.msra.mxu0 0.0
    %127 = vmatprep.subr.mxu0 0.0
    %128 = vmatpush2.msra.mxu0 0.0
    %129 = vmatprep.subr.mxu0 0.0
    %130 = vmatpush2.msra.mxu0 0.0
    %131 = vmatprep.subr.mxu0 0.0
    %132 = vmatpush2.msra.mxu0 0.0
    %133 = vmatprep.subr.mxu0 0.0
    %134 = vmatpush2.msra.mxu0 0.0
    %135 = vmatprep.subr.mxu0 0.0
    %136 = vmatpush2.msra.mxu0 0.0
    %137 = vmatprep.subr.mxu0 0.0
    %138 = vmatpush2.msra.mxu0 0.0
    %139 = vmatprep.subr.mxu0 0.0
    %140 = vmatpush2.msra.mxu0 0.0
    %141 = vmatprep.subr.mxu0 0.0
    %142 = vmatpush2.msra.mxu0 0.0
    %143 = vmatprep.subr.mxu0 0.0
    %144 = vmatpush2.msra.mxu0 0.0
    %145 = vmatprep.subr.mxu0 0.0
    %146 = vmatpush2.msra.mxu0 0.0
    %147 = vmatprep.subr.mxu0 0.0
    %148 = vmatpush2.msra.mxu0 0.0
    %149 = vmatprep.subr.mxu0 0.0
    %150 = vmatpush2.msra.mxu0 0.0
    %151 = vmatprep.mubr.f32.mxu0 0.0
    %152 = vmatmul.mubr.f32.gmra.mxu0 %v62
    %v153 = vpop.f32.mrf.mxu0
    %v154 = vadd.f32 %v85, %v153
    %v155 = vpop.f32.mrf.mxu0
    %156 = vmatprep.mubr.f32.mxu0 0.0
    %157 = vmatmul.mubr.f32.gmra.mxu0 %v63
    %v158 = vpop.f32.mrf.mxu0
    %v159 = vadd.f32 %v85, %v158
    %v160 = vpop.f32.mrf.mxu0
    %161 = vdwg.mxu0
    %v162 = vmax.f32 %v154, 0.0
    %v163 = vmax.f32 %v159, 0.0
    %v164 = vld [vmem:[#allocation7] sm:$0xff]
    %v165 = vld [vmem:[#allocation7 + $0x8] sm:$0xff]
    %v166 = vld [vmem:[#allocation7 + $0x10] sm:$0xff]
    %v167 = vld [vmem:[#allocation7 + $0x18] sm:$0xff]
    %v168 = vld [vmem:[#allocation7 + $0x20] sm:$0xff]
    %v169 = vld [vmem:[#allocation7 + $0x28] sm:$0xff]
    %v170 = vld [vmem:[#allocation7 + $0x30] sm:$0xff]
    %v171 = vld [vmem:[#allocation7 + $0x38] sm:$0xff]
    %v172 = vld [vmem:[#allocation7 + $0x40] sm:$0xff]
    %v173 = vld [vmem:[#allocation7 + $0x48] sm:$0xff]
    %v174 = vld [vmem:[#allocation7 + $0x50] sm:$0xff]
    %v175 = vld [vmem:[#allocation7 + $0x58] sm:$0xff]
    %v176 = vld [vmem:[#allocation7 + $0x60] sm:$0xff]
    %v177 = vld [vmem:[#allocation7 + $0x68] sm:$0xff]
    %v178 = vld [vmem:[#allocation7 + $0x70] sm:$0xff]
    %v179 = vld [vmem:[#allocation7 + $0x78] sm:$0xff]
    %v180 = vld [vmem:[%s4] sm:$0x1]
    %v182 = vlaneseq
    %v183 = vshrl.u32 %v182, 7
    %v184 = vsub.s32 0, %v183
    %v185 = vrot.slane %v180, %v184
    %187 = vmatprep.subr.mxu0 0.0
    %188 = vmatpush1.msra.mxu0 %v179
    %189 = vmatprep.subr.mxu0 0.0
    %190 = vmatpush1.msra.mxu0 %v178
    %191 = vmatprep.subr.mxu0 0.0
    %192 = vmatpush1.msra.mxu0 %v177
    %193 = vmatprep.subr.mxu0 0.0
    %194 = vmatpush1.msra.mxu0 %v176
    %195 = vmatprep.subr.mxu0 0.0
    %196 = vmatpush1.msra.mxu0 %v175
    %197 = vmatprep.subr.mxu0 0.0
    %198 = vmatpush1.msra.mxu0 %v174
    %199 = vmatprep.subr.mxu0 0.0
    %200 = vmatpush1.msra.mxu0 %v173
    %201 = vmatprep.subr.mxu0 0.0
    %202 = vmatpush1.msra.mxu0 %v172
    %203 = vmatprep.subr.mxu0 0.0
    %204 = vmatpush1.msra.mxu0 %v171
    %205 = vmatprep.subr.mxu0 0.0
    %206 = vmatpush1.msra.mxu0 %v170
    %207 = vmatprep.subr.mxu0 0.0
    %208 = vmatpush1.msra.mxu0 %v169
    %209 = vmatprep.subr.mxu0 0.0
    %210 = vmatpush1.msra.mxu0 %v168
    %211 = vmatprep.subr.mxu0 0.0
    %212 = vmatpush1.msra.mxu0 %v167
    %213 = vmatprep.subr.mxu0 0.0
    %214 = vmatpush1.msra.mxu0 %v166
    %215 = vmatprep.subr.mxu0 0.0
    %216 = vmatpush1.msra.mxu0 %v165
    %217 = vmatprep.subr.mxu0 0.0
    %218 = vmatpush1.msra.mxu0 %v164
    %219 = vmatprep.subr.mxu0 0.0
    %220 = vmatpush2.msra.mxu0 0.0
    %221 = vmatprep.subr.mxu0 0.0
    %222 = vmatpush2.msra.mxu0 0.0
    %223 = vmatprep.subr.mxu0 0.0
    %224 = vmatpush2.msra.mxu0 0.0
    %225 = vmatprep.subr.mxu0 0.0
    %226 = vmatpush2.msra.mxu0 0.0
    %227 = vmatprep.subr.mxu0 0.0
    %228 = vmatpush2.msra.mxu0 0.0
    %229 = vmatprep.subr.mxu0 0.0
    %230 = vmatpush2.msra.mxu0 0.0
    %231 = vmatprep.subr.mxu0 0.0
    %232 = vmatpush2.msra.mxu0 0.0
    %233 = vmatprep.subr.mxu0 0.0
    %234 = vmatpush2.msra.mxu0 0.0
    %235 = vmatprep.subr.mxu0 0.0
    %236 = vmatpush2.msra.mxu0 0.0
    %237 = vmatprep.subr.mxu0 0.0
    %238 = vmatpush2.msra.mxu0 0.0
    %239 = vmatprep.subr.mxu0 0.0
    %240 = vmatpush2.msra.mxu0 0.0
    %241 = vmatprep.subr.mxu0 0.0
    %242 = vmatpush2.msra.mxu0 0.0
    %243 = vmatprep.subr.mxu0 0.0
    %244 = vmatpush2.msra.mxu0 0.0
    %245 = vmatprep.subr.mxu0 0.0
    %246 = vmatpush2.msra.mxu0 0.0
    %247 = vmatprep.subr.mxu0 0.0
    %248 = vmatpush2.msra.mxu0 0.0
    %249 = vmatprep.subr.mxu0 0.0
    %250 = vmatpush2.msra.mxu0 0.0
    %251 = vmatprep.mubr.f32.mxu0 0.0
    %252 = vmatmul.mubr.f32.gmra.mxu0 %v162
    %v253 = vpop.f32.mrf.mxu0
    %v254 = vadd.f32 %v185, %v253
    %v255 = vpop.f32.mrf.mxu0
    %256 = vmatprep.mubr.f32.mxu0 0.0
    %257 = vmatmul.mubr.f32.gmra.mxu0 %v163
    %v258 = vpop.f32.mrf.mxu0
    %v259 = vadd.f32 %v185, %v258
    %v260 = vpop.f32.mrf.mxu0
    %261 = vdwg.mxu0
    %262 = vst [vmem:[#allocation8] sm:$0xff] %v254
    %263 = vst [vmem:[#allocation8 + $0x8] sm:$0xff] %v259
    // Predicated region
    $region34: #{tpu_custom_call.1} parent=1 // pred_check
      _
    $region35: #{tpu_custom_call.1} parent=1 // pred_check_branch
      %265 = sbr.rel (0) target = $region37
    $region36: #{tpu_custom_call.1} parent=1 // pred_region
      %s267 = ssub.s32 256, 256
      %268 = vsyncadd [#allocation4], %s267
      %s269 = sshll.u32 [#allocation8], 4
      %s270 = int_to_ptr.vmem [resolvable:$true] %s269
      %275 = dma.vmem_to_hbm [thread:$0]  %s270, 256, %s5, [#allocation4], 128, 128, 8
    $region37: #{tpu_custom_call.1} parent=1 // pred_fallthru
      _
    // Predicated region
    $region38: #{tpu_custom_call.1} parent=1 // pred_check
      _
    $region39: #{tpu_custom_call.1} parent=1 // pred_check_branch
      %277 = sbr.rel (0) target = $region41
    $region40: #{tpu_custom_call.1} parent=1 // pred_region
      %278 = dma.done [#allocation4], 256
    $region41: #{tpu_custom_call.1} parent=1 // pred_fallthru
      _
    %279 = vsyncpa [#allocation3], 1
    %280 = vsyncpa [#allocation6], 1
    %281 = vsyncpa [#allocation4], 1

</llo_original>
